<compile_context>
chip_gen: v7x
topology: tpu7x:2x2x1
jax: 0.10.0
libtpu: 0.0.40
codegen_flags: <defaults>
</compile_context>

<pallas_src>
import functools

import jax
import jax.numpy as jnp
from jax.experimental import pallas as pl
from jax.experimental.pallas import tpu as pltpu


def _round_up(x, m):
    return (x + m - 1) // m * m


# ----------------------------------------------------------------------------
# Fused Bottleneck kernel (one grid step == one image)
# ----------------------------------------------------------------------------
def _bottleneck_kernel(x_ref, masks_ref, w1_ref, b1_ref, w2_ref, b2_ref,
                       w3_ref, b3_ref, o_ref, pad_ref, col_ref,
                       *, H, W, c_mid, c_mid_pad, pad_off, compute_dtype):
    HW = H * W
    f32 = jnp.float32
    x = x_ref[0]                                         # (c_in, HW)

    # ---- stage 1: 1x1 conv (BN folded into w1) + ReLU --------------------
    # (c_mid, HW) = (c_mid, c_in) @ (c_in, HW)
    y1 = jnp.dot(w1_ref[...], x.astype(compute_dtype),
                 preferred_element_type=f32)
    y1 = jnp.maximum(y1 + b1_ref[...], 0.0)

    # ---- stage 2: 3x3 conv (pad=1) via flat halo buffer + im2col ---------
    # Re-zero only the halo slack every step (interior is fully overwritten;
    # megacore-safe: no reliance on cross-step scratch state).
    pad_ref[:, pl.ds(0, pad_off)] = jnp.zeros(
        (pad_ref.shape[0], pad_off), pad_ref.dtype)
    pad_ref[:, pl.ds(pad_off + HW, pad_off)] = jnp.zeros(
        (pad_ref.shape[0], pad_off), pad_ref.dtype)
    pad_ref[:, pl.ds(pad_off, HW)] = y1.astype(pad_ref.dtype)

    if c_mid_pad != c_mid:
        # Sublane filler rows feed zero weight columns; just keep them finite.
        col_ref[...] = jnp.zeros_like(col_ref)

    base = pad_off - W - 1
    for kh in range(3):
        for kw in range(3):
            # Tap (kh, kw) is a contiguous lane slice of the flat padded image.
            tap = pad_ref[:, pl.ds(base + kh * W + kw, HW)]   # (c_mid, HW)
            if kw == 0:   # zero columns that wrapped across a row boundary
                tap = tap * masks_ref[pl.ds(0, 1), :]
            elif kw == 2:
                tap = tap * masks_ref[pl.ds(1, 1), :]
            col_ref[pl.ds((kh * 3 + kw) * c_mid_pad, c_mid), :] = tap

    # Single im2col matmul: (c_mid, 9*c_mid_pad) @ (9*c_mid_pad, HW)
    y2 = jnp.dot(w2_ref[...], col_ref[...], preferred_element_type=f32)
    y2 = jnp.maximum(y2 + b2_ref[...], 0.0)

    # ---- stage 3: 1x1 conv (BN folded) + identity residual (no ReLU) -----
    y3 = jnp.dot(w3_ref[...], y2.astype(compute_dtype),
                 preferred_element_type=f32)
    y3 = y3 + b3_ref[...] + x.astype(f32)
    o_ref[0] = y3.astype(o_ref.dtype)


# ----------------------------------------------------------------------------
# Wrapper: BN folding, weight pre-transposition, pallas_call
# ----------------------------------------------------------------------------
def fold_bn(conv_bias, gamma, beta, mean, var, eps=1e-5):
    scale = gamma / jnp.sqrt(var + eps)
    bias = (conv_bias - mean) * scale + beta
    return scale, bias


def bottleneck_forward(x_nchw, params, *, compute_dtype=jnp.float32):
    """Full fused Bottleneck forward. Input/output are NCHW (PyTorch layout)."""
    N, c_in, H, W = x_nchw.shape
    HW = H * W
    c_mid = params["w1"].shape[1]
    c_out = params["w3"].shape[1]
    assert c_out == c_in, "identity residual requires in_plane == plane * 4"

    # Fold BN (eval mode) into conv weights / biases; pre-transpose weights so
    # the kernel computes (Cout, Cin) @ (Cin, H*W) directly in NCHW layout.
    s1, b1 = fold_bn(params["cb1"], params["g1"], params["be1"],
                     params["m1"], params["v1"])
    s2, b2 = fold_bn(params["cb2"], params["g2"], params["be2"],
                     params["m2"], params["v2"])
    s3, b3 = fold_bn(params["cb3"], params["g3"], params["be3"],
                     params["m3"], params["v3"])

    w1m = (params["w1"] * s1[None, :]).T.astype(compute_dtype)      # (c_mid, c_in)

    c_mid_pad = _round_up(c_mid, 8)                                  # sublane align
    w2s = params["w2"] * s2[None, None, None, :]                     # (3,3,ci,co)
    w2t = jnp.transpose(w2s, (3, 0, 1, 2))                           # (co,3,3,ci)
    w2t = jnp.pad(w2t, ((0, 0), (0, 0), (0, 0), (0, c_mid_pad - c_mid)))
    w2m = w2t.reshape(c_mid, 9 * c_mid_pad).astype(compute_dtype)    # (co, 9*ci_pad)

    w3m = (params["w3"] * s3[None, :]).T.astype(compute_dtype)       # (c_out, c_mid)

    b1c = b1.reshape(c_mid, 1).astype(jnp.float32)
    b2c = b2.reshape(c_mid, 1).astype(jnp.float32)
    b3c = b3.reshape(c_out, 1).astype(jnp.float32)

    # Lane masks that zero the tap columns which wrapped across an image row.
    o_idx = jnp.arange(HW, dtype=jnp.int32) % W
    edge_masks = jnp.stack([(o_idx != 0), (o_idx != W - 1)]).astype(compute_dtype)

    # NCHW kept end to end; collapsing H,W is a free metadata reshape.
    x_flat = x_nchw.reshape(N, c_in, HW)

    pad_off = _round_up(W + 1, 128)          # aligned interior offset in the flat buffer
    pad_len = 2 * pad_off + HW               # halo rows + edge elements live in the slack

    kernel = functools.partial(
        _bottleneck_kernel, H=H, W=W, c_mid=c_mid, c_mid_pad=c_mid_pad,
        pad_off=pad_off, compute_dtype=compute_dtype)

    out = pl.pallas_call(
        kernel,
        out_shape=jax.ShapeDtypeStruct((N, c_out, HW), x_nchw.dtype),
        grid_spec=pltpu.PrefetchScalarGridSpec(
            num_scalar_prefetch=0,
            grid=(N,),
            in_specs=[
                pl.BlockSpec((1, c_in, HW), lambda n: (n, 0, 0)),
                pl.BlockSpec((2, HW), lambda n: (0, 0)),
                pl.BlockSpec((c_mid, c_in), lambda n: (0, 0)),
                pl.BlockSpec((c_mid, 1), lambda n: (0, 0)),
                pl.BlockSpec((c_mid, 9 * c_mid_pad), lambda n: (0, 0)),
                pl.BlockSpec((c_mid, 1), lambda n: (0, 0)),
                pl.BlockSpec((c_out, c_mid), lambda n: (0, 0)),
                pl.BlockSpec((c_out, 1), lambda n: (0, 0)),
            ],
            out_specs=pl.BlockSpec((1, c_out, HW), lambda n: (n, 0, 0)),
            scratch_shapes=[
                pltpu.VMEM((c_mid, pad_len), compute_dtype),          # flat halo buf
                pltpu.VMEM((9 * c_mid_pad, HW), compute_dtype),       # im2col buf
            ],
        ),
        compiler_params=pltpu.CompilerParams(
            dimension_semantics=("parallel",),
            vmem_limit_bytes=64 * 1024 * 1024,
        ),
        # NOTE: input_output_aliases={0: 0} would let the output reuse x's HBM
        # buffer, but only helps when the caller donates x; skipped here.
    )(x_flat, edge_masks, w1m, b1c, w2m, b2c, w3m, b3c)
    return out.reshape(N, c_out, H, W)


# ----------------------------------------------------------------------------
# Pure-JAX reference (lax conv) for validation
# ----------------------------------------------------------------------------
def reference_forward(x_nchw, params):
    x = jnp.transpose(x_nchw, (0, 2, 3, 1))
    dn = ("NHWC", "HWIO", "NHWC")
    prec = jax.lax.Precision.HIGHEST

    def bn(z, cb, g, be, m, v):
        s, b = fold_bn(cb, g, be, m, v)
        return z * s + b

    w1 = params["w1"][None, None]
    y = jax.lax.conv_general_dilated(x, w1, (1, 1), "VALID",
                                     dimension_numbers=dn, precision=prec)
    y = jax.nn.relu(bn(y, params["cb1"], params["g1"], params["be1"],
                       params["m1"], params["v1"]))
    y = jax.lax.conv_general_dilated(y, params["w2"], (1, 1),
                                     [(1, 1), (1, 1)], dimension_numbers=dn,
                                     precision=prec)
    y = jax.nn.relu(bn(y, params["cb2"], params["g2"], params["be2"],
                       params["m2"], params["v2"]))
    w3 = params["w3"][None, None]
    y = jax.lax.conv_general_dilated(y, w3, (1, 1), "VALID",
                                     dimension_numbers=dn, precision=prec)
    y = bn(y, params["cb3"], params["g3"], params["be3"],
           params["m3"], params["v3"])
    y = y + x
    return jnp.transpose(y, (0, 3, 1, 2))


if __name__ == "__main__":
    key = jax.random.PRNGKey(0)
    ks = jax.random.split(key, 16)

    # Identity residual (down_sample=None) requires in_plane == plane*4.
    N, H, W = 2, 16, 16
    plane = 4
    expansion = 4
    in_plane = plane * expansion          # 16
    out_plane = plane * expansion         # 16

    x = jax.random.normal(ks[0], (N, in_plane, H, W), jnp.float32)

    params = {
        # block1: 1x1 conv (Cin, Cout) + BN(plane)
        "w1": 0.1 * jax.random.normal(ks[1], (in_plane, plane), jnp.float32),
        "cb1": 0.05 * jax.random.normal(ks[2], (plane,), jnp.float32),
        "g1": 1.0 + 0.1 * jax.random.normal(ks[3], (plane,), jnp.float32),
        "be1": 0.1 * jax.random.normal(ks[4], (plane,), jnp.float32),
        "m1": 0.05 * jnp.arange(plane, dtype=jnp.float32),
        "v1": 1.0 + 0.1 * jnp.arange(plane, dtype=jnp.float32),
        # block2: 3x3 conv HWIO + BN(plane)
        "w2": 0.1 * jax.random.normal(ks[5], (3, 3, plane, plane), jnp.float32),
        "cb2": 0.05 * jax.random.normal(ks[6], (plane,), jnp.float32),
        "g2": 1.0 + 0.1 * jax.random.normal(ks[7], (plane,), jnp.float32),
        "be2": 0.1 * jax.random.normal(ks[8], (plane,), jnp.float32),
        "m2": 0.03 * jnp.arange(plane, dtype=jnp.float32),
        "v2": 1.0 + 0.05 * jnp.arange(plane, dtype=jnp.float32),
        # conv1: 1x1 conv (plane -> plane*4) + BN(plane*4)
        "w3": 0.1 * jax.random.normal(ks[9], (plane, out_plane), jnp.float32),
        "cb3": 0.05 * jax.random.normal(ks[10], (out_plane,), jnp.float32),
        "g3": 1.0 + 0.1 * jax.random.normal(ks[11], (out_plane,), jnp.float32),
        "be3": 0.1 * jax.random.normal(ks[12], (out_plane,), jnp.float32),
        "m3": 0.02 * jnp.arange(out_plane, dtype=jnp.float32),
        "v3": 1.0 + 0.05 * jnp.arange(out_plane, dtype=jnp.float32),
    }

    ref = jax.block_until_ready(reference_forward(x, params))

    # f32 operands (exact check)
    out_f32 = jax.block_until_ready(
        bottleneck_forward(x, params, compute_dtype=jnp.float32))
    assert out_f32.shape == (N, out_plane, H, W), out_f32.shape
    assert jnp.allclose(out_f32, ref, rtol=5e-4, atol=5e-4), \
        float(jnp.max(jnp.abs(out_f32 - ref)))

    # bf16 MXU operands, f32 accumulation/epilogue (loose check)
    out_bf16 = jax.block_until_ready(
        bottleneck_forward(x, params, compute_dtype=jnp.bfloat16))
    assert out_bf16.shape == (N, out_plane, H, W), out_bf16.shape
    assert jnp.allclose(out_bf16, ref, rtol=5e-2, atol=5e-2), \
        float(jnp.max(jnp.abs(out_bf16 - ref)))

    print("KERNEL_OK")
</pallas_src>

<mosaic_0001>
module attributes {stable_mosaic.version = 11 : i64} {
  func.func @_bottleneck_kernel(%arg0: i32, %arg1: memref<1x16x256xf32, #tpu.memory_space<vmem>>, %arg2: memref<2x256xf32, #tpu.memory_space<vmem>>, %arg3: memref<4x16xf32, #tpu.memory_space<vmem>>, %arg4: memref<4x1xf32, #tpu.memory_space<vmem>>, %arg5: memref<4x72xf32, #tpu.memory_space<vmem>>, %arg6: memref<4x1xf32, #tpu.memory_space<vmem>>, %arg7: memref<16x4xf32, #tpu.memory_space<vmem>>, %arg8: memref<16x1xf32, #tpu.memory_space<vmem>>, %arg9: memref<1x16x256xf32, #tpu.memory_space<vmem>>, %arg10: memref<4x512xf32, #tpu.memory_space<vmem>>, %arg11: memref<72x256xf32, #tpu.memory_space<vmem>>) attributes {dimension_semantics = [#tpu.dimension_semantics<parallel>], iteration_bounds = array<i64: 2>, scalar_prefetch = 0 : i64, scratch_operands = 2 : i64, tpu.core_type = #tpu.core_type<tc>, window_params = [{transform_indices = @transform_0, window_bounds = array<i64: 1, 16, 256>}, {pipeline_mode = #tpu.pipeline_mode<synchronous>, transform_indices = @transform_1, window_bounds = array<i64: 2, 256>}, {pipeline_mode = #tpu.pipeline_mode<synchronous>, transform_indices = @transform_2, window_bounds = array<i64: 4, 16>}, {pipeline_mode = #tpu.pipeline_mode<synchronous>, transform_indices = @transform_3, window_bounds = array<i64: 4, 1>}, {pipeline_mode = #tpu.pipeline_mode<synchronous>, transform_indices = @transform_4, window_bounds = array<i64: 4, 72>}, {pipeline_mode = #tpu.pipeline_mode<synchronous>, transform_indices = @transform_5, window_bounds = array<i64: 4, 1>}, {pipeline_mode = #tpu.pipeline_mode<synchronous>, transform_indices = @transform_6, window_bounds = array<i64: 16, 4>}, {pipeline_mode = #tpu.pipeline_mode<synchronous>, transform_indices = @transform_7, window_bounds = array<i64: 16, 1>}, {transform_indices = @transform_8, window_bounds = array<i64: 1, 16, 256>}]} {
    %c0 = arith.constant 0 : index
    %c0_0 = arith.constant 0 : index
    %c0_1 = arith.constant 0 : index
    %0 = vector.load %arg1[%c0, %c0_0, %c0_1] : memref<1x16x256xf32, #tpu.memory_space<vmem>>, vector<1x16x256xf32>
    %1 = vector.shape_cast %0 : vector<1x16x256xf32> to vector<16x256xf32>
    %c0_2 = arith.constant 0 : index
    %c0_3 = arith.constant 0 : index
    %2 = vector.load %arg3[%c0_2, %c0_3] : memref<4x16xf32, #tpu.memory_space<vmem>>, vector<4x16xf32>
    %cst = arith.constant dense<0.000000e+00> : vector<4x256xf32>
    %3 = tpu.matmul %2, %1, %cst {dimension_numbers = #tpu.dot_dimension_numbers<[1], [0], [0], [1], [0, 0, 1, 1], [], []>} : vector<4x16xf32>, vector<16x256xf32>, vector<4x256xf32> -> vector<4x256xf32>
    %c0_4 = arith.constant 0 : index
    %c0_5 = arith.constant 0 : index
    %4 = vector.load %arg4[%c0_4, %c0_5] : memref<4x1xf32, #tpu.memory_space<vmem>>, vector<4x1xf32>
    %5 = vector.broadcast %4 : vector<4x1xf32> to vector<4x256xf32>
    %6 = arith.addf %3, %5 : vector<4x256xf32>
    %cst_6 = arith.constant 0.000000e+00 : f32
    %7 = vector.broadcast %cst_6 : f32 to vector<4x256xf32>
    %8 = arith.maximumf %6, %7 : vector<4x256xf32>
    %cst_7 = arith.constant 0.000000e+00 : f32
    %9 = vector.broadcast %cst_7 : f32 to vector<4x128xf32>
    %c0_8 = arith.constant 0 : index
    %c0_9 = arith.constant 0 : index
    %10 = vector.load %arg10[%c0_8, %c0_9] : memref<4x512xf32, #tpu.memory_space<vmem>>, vector<4x128xf32>
    tpu.vector_store %arg10[%c0_8, %c0_9], %9 {strides = array<i32>} : memref<4x512xf32, #tpu.memory_space<vmem>>, vector<4x128xf32>,
    %cst_10 = arith.constant 0.000000e+00 : f32
    %11 = vector.broadcast %cst_10 : f32 to vector<4x128xf32>
    %c0_11 = arith.constant 0 : index
    %c384 = arith.constant 384 : index
    %12 = vector.load %arg10[%c0_11, %c384] : memref<4x512xf32, #tpu.memory_space<vmem>>, vector<4x128xf32>
    tpu.vector_store %arg10[%c0_11, %c384], %11 {strides = array<i32>} : memref<4x512xf32, #tpu.memory_space<vmem>>, vector<4x128xf32>,
    %c0_12 = arith.constant 0 : index
    %c128 = arith.constant 128 : index
    %13 = vector.load %arg10[%c0_12, %c128] : memref<4x512xf32, #tpu.memory_space<vmem>>, vector<4x256xf32>
    tpu.vector_store %arg10[%c0_12, %c128], %8 {strides = array<i32>} : memref<4x512xf32, #tpu.memory_space<vmem>>, vector<4x256xf32>,
    %cst_13 = arith.constant 0.000000e+00 : f32
    %14 = vector.broadcast %cst_13 : f32 to vector<72x256xf32>
    %c0_14 = arith.constant 0 : index
    %c0_15 = arith.constant 0 : index
    %15 = vector.load %arg11[%c0_14, %c0_15] : memref<72x256xf32, #tpu.memory_space<vmem>>, vector<72x256xf32>
    tpu.vector_store %arg11[%c0_14, %c0_15], %14 {strides = array<i32>} : memref<72x256xf32, #tpu.memory_space<vmem>>, vector<72x256xf32>,
    %c0_16 = arith.constant 0 : index
    %c111 = arith.constant 111 : index
    %16 = vector.load %arg10[%c0_16, %c111] : memref<4x512xf32, #tpu.memory_space<vmem>>, vector<4x256xf32>
    %c0_17 = arith.constant 0 : index
    %c0_18 = arith.constant 0 : index
    %17 = vector.load %arg2[%c0_17, %c0_18] : memref<2x256xf32, #tpu.memory_space<vmem>>, vector<1x256xf32>
    %18 = vector.broadcast %17 : vector<1x256xf32> to vector<4x256xf32>
    %19 = arith.mulf %16, %18 : vector<4x256xf32>
    %c0_19 = arith.constant 0 : index
    %c0_20 = arith.constant 0 : index
    %20 = vector.load %arg11[%c0_19, %c0_20] : memref<72x256xf32, #tpu.memory_space<vmem>>, vector<4x256xf32>
    tpu.vector_store %arg11[%c0_19, %c0_20], %19 {strides = array<i32>} : memref<72x256xf32, #tpu.memory_space<vmem>>, vector<4x256xf32>,
    %c0_21 = arith.constant 0 : index
    %c112 = arith.constant 112 : index
    %21 = vector.load %arg10[%c0_21, %c112] : memref<4x512xf32, #tpu.memory_space<vmem>>, vector<4x256xf32>
    %c8 = arith.constant 8 : index
    %c0_22 = arith.constant 0 : index
    %22 = vector.load %arg11[%c8, %c0_22] : memref<72x256xf32, #tpu.memory_space<vmem>>, vector<4x256xf32>
    tpu.vector_store %arg11[%c8, %c0_22], %21 {strides = array<i32>} : memref<72x256xf32, #tpu.memory_space<vmem>>, vector<4x256xf32>,
    %c0_23 = arith.constant 0 : index
    %c113 = arith.constant 113 : index
    %23 = vector.load %arg10[%c0_23, %c113] : memref<4x512xf32, #tpu.memory_space<vmem>>, vector<4x256xf32>
    %c1 = arith.constant 1 : index
    %c0_24 = arith.constant 0 : index
    %24 = vector.load %arg2[%c1, %c0_24] : memref<2x256xf32, #tpu.memory_space<vmem>>, vector<1x256xf32>
    %25 = vector.broadcast %24 : vector<1x256xf32> to vector<4x256xf32>
    %26 = arith.mulf %23, %25 : vector<4x256xf32>
    %c16 = arith.constant 16 : index
    %c0_25 = arith.constant 0 : index
    %27 = vector.load %arg11[%c16, %c0_25] : memref<72x256xf32, #tpu.memory_space<vmem>>, vector<4x256xf32>
    tpu.vector_store %arg11[%c16, %c0_25], %26 {strides = array<i32>} : memref<72x256xf32, #tpu.memory_space<vmem>>, vector<4x256xf32>,
    %c0_26 = arith.constant 0 : index
    %c127 = arith.constant 127 : index
    %28 = vector.load %arg10[%c0_26, %c127] : memref<4x512xf32, #tpu.memory_space<vmem>>, vector<4x256xf32>
    %c0_27 = arith.constant 0 : index
    %c0_28 = arith.constant 0 : index
    %29 = vector.load %arg2[%c0_27, %c0_28] : memref<2x256xf32, #tpu.memory_space<vmem>>, vector<1x256xf32>
    %30 = vector.broadcast %29 : vector<1x256xf32> to vector<4x256xf32>
    %31 = arith.mulf %28, %30 : vector<4x256xf32>
    %c24 = arith.constant 24 : index
    %c0_29 = arith.constant 0 : index
    %32 = vector.load %arg11[%c24, %c0_29] : memref<72x256xf32, #tpu.memory_space<vmem>>, vector<4x256xf32>
    tpu.vector_store %arg11[%c24, %c0_29], %31 {strides = array<i32>} : memref<72x256xf32, #tpu.memory_space<vmem>>, vector<4x256xf32>,
    %c0_30 = arith.constant 0 : index
    %c128_31 = arith.constant 128 : index
    %33 = vector.load %arg10[%c0_30, %c128_31] : memref<4x512xf32, #tpu.memory_space<vmem>>, vector<4x256xf32>
    %c32 = arith.constant 32 : index
    %c0_32 = arith.constant 0 : index
    %34 = vector.load %arg11[%c32, %c0_32] : memref<72x256xf32, #tpu.memory_space<vmem>>, vector<4x256xf32>
    tpu.vector_store %arg11[%c32, %c0_32], %33 {strides = array<i32>} : memref<72x256xf32, #tpu.memory_space<vmem>>, vector<4x256xf32>,
    %c0_33 = arith.constant 0 : index
    %c129 = arith.constant 129 : index
    %35 = vector.load %arg10[%c0_33, %c129] : memref<4x512xf32, #tpu.memory_space<vmem>>, vector<4x256xf32>
    %c1_34 = arith.constant 1 : index
    %c0_35 = arith.constant 0 : index
    %36 = vector.load %arg2[%c1_34, %c0_35] : memref<2x256xf32, #tpu.memory_space<vmem>>, vector<1x256xf32>
    %37 = vector.broadcast %36 : vector<1x256xf32> to vector<4x256xf32>
    %38 = arith.mulf %35, %37 : vector<4x256xf32>
    %c40 = arith.constant 40 : index
    %c0_36 = arith.constant 0 : index
    %39 = vector.load %arg11[%c40, %c0_36] : memref<72x256xf32, #tpu.memory_space<vmem>>, vector<4x256xf32>
    tpu.vector_store %arg11[%c40, %c0_36], %38 {strides = array<i32>} : memref<72x256xf32, #tpu.memory_space<vmem>>, vector<4x256xf32>,
    %c0_37 = arith.constant 0 : index
    %c143 = arith.constant 143 : index
    %40 = vector.load %arg10[%c0_37, %c143] : memref<4x512xf32, #tpu.memory_space<vmem>>, vector<4x256xf32>
    %c0_38 = arith.constant 0 : index
    %c0_39 = arith.constant 0 : index
    %41 = vector.load %arg2[%c0_38, %c0_39] : memref<2x256xf32, #tpu.memory_space<vmem>>, vector<1x256xf32>
    %42 = vector.broadcast %41 : vector<1x256xf32> to vector<4x256xf32>
    %43 = arith.mulf %40, %42 : vector<4x256xf32>
    %c48 = arith.constant 48 : index
    %c0_40 = arith.constant 0 : index
    %44 = vector.load %arg11[%c48, %c0_40] : memref<72x256xf32, #tpu.memory_space<vmem>>, vector<4x256xf32>
    tpu.vector_store %arg11[%c48, %c0_40], %43 {strides = array<i32>} : memref<72x256xf32, #tpu.memory_space<vmem>>, vector<4x256xf32>,
    %c0_41 = arith.constant 0 : index
    %c144 = arith.constant 144 : index
    %45 = vector.load %arg10[%c0_41, %c144] : memref<4x512xf32, #tpu.memory_space<vmem>>, vector<4x256xf32>
    %c56 = arith.constant 56 : index
    %c0_42 = arith.constant 0 : index
    %46 = vector.load %arg11[%c56, %c0_42] : memref<72x256xf32, #tpu.memory_space<vmem>>, vector<4x256xf32>
    tpu.vector_store %arg11[%c56, %c0_42], %45 {strides = array<i32>} : memref<72x256xf32, #tpu.memory_space<vmem>>, vector<4x256xf32>,
    %c0_43 = arith.constant 0 : index
    %c145 = arith.constant 145 : index
    %47 = vector.load %arg10[%c0_43, %c145] : memref<4x512xf32, #tpu.memory_space<vmem>>, vector<4x256xf32>
    %c1_44 = arith.constant 1 : index
    %c0_45 = arith.constant 0 : index
    %48 = vector.load %arg2[%c1_44, %c0_45] : memref<2x256xf32, #tpu.memory_space<vmem>>, vector<1x256xf32>
    %49 = vector.broadcast %48 : vector<1x256xf32> to vector<4x256xf32>
    %50 = arith.mulf %47, %49 : vector<4x256xf32>
    %c64 = arith.constant 64 : index
    %c0_46 = arith.constant 0 : index
    %51 = vector.load %arg11[%c64, %c0_46] : memref<72x256xf32, #tpu.memory_space<vmem>>, vector<4x256xf32>
    tpu.vector_store %arg11[%c64, %c0_46], %50 {strides = array<i32>} : memref<72x256xf32, #tpu.memory_space<vmem>>, vector<4x256xf32>,
    %c0_47 = arith.constant 0 : index
    %c0_48 = arith.constant 0 : index
    %52 = vector.load %arg5[%c0_47, %c0_48] : memref<4x72xf32, #tpu.memory_space<vmem>>, vector<4x72xf32>
    %c0_49 = arith.constant 0 : index
    %c0_50 = arith.constant 0 : index
    %53 = vector.load %arg11[%c0_49, %c0_50] : memref<72x256xf32, #tpu.memory_space<vmem>>, vector<72x256xf32>
    %cst_51 = arith.constant dense<0.000000e+00> : vector<4x256xf32>
    %54 = tpu.matmul %52, %53, %cst_51 {dimension_numbers = #tpu.dot_dimension_numbers<[1], [0], [0], [1], [0, 0, 1, 1], [], []>} : vector<4x72xf32>, vector<72x256xf32>, vector<4x256xf32> -> vector<4x256xf32>
    %c0_52 = arith.constant 0 : index
    %c0_53 = arith.constant 0 : index
    %55 = vector.load %arg6[%c0_52, %c0_53] : memref<4x1xf32, #tpu.memory_space<vmem>>, vector<4x1xf32>
    %56 = vector.broadcast %55 : vector<4x1xf32> to vector<4x256xf32>
    %57 = arith.addf %54, %56 : vector<4x256xf32>
    %cst_54 = arith.constant 0.000000e+00 : f32
    %58 = vector.broadcast %cst_54 : f32 to vector<4x256xf32>
    %59 = arith.maximumf %57, %58 : vector<4x256xf32>
    %c0_55 = arith.constant 0 : index
    %c0_56 = arith.constant 0 : index
    %60 = vector.load %arg7[%c0_55, %c0_56] : memref<16x4xf32, #tpu.memory_space<vmem>>, vector<16x4xf32>
    %cst_57 = arith.constant dense<0.000000e+00> : vector<16x256xf32>
    %61 = tpu.matmul %60, %59, %cst_57 {dimension_numbers = #tpu.dot_dimension_numbers<[1], [0], [0], [1], [0, 0, 1, 1], [], []>} : vector<16x4xf32>, vector<4x256xf32>, vector<16x256xf32> -> vector<16x256xf32>
    %c0_58 = arith.constant 0 : index
    %c0_59 = arith.constant 0 : index
    %62 = vector.load %arg8[%c0_58, %c0_59] : memref<16x1xf32, #tpu.memory_space<vmem>>, vector<16x1xf32>
    %63 = vector.broadcast %62 : vector<16x1xf32> to vector<16x256xf32>
    %64 = arith.addf %61, %63 : vector<16x256xf32>
    %65 = arith.addf %64, %1 : vector<16x256xf32>
    %c0_60 = arith.constant 0 : index
    %c0_61 = arith.constant 0 : index
    %c0_62 = arith.constant 0 : index
    %66 = vector.load %arg9[%c0_60, %c0_61, %c0_62] : memref<1x16x256xf32, #tpu.memory_space<vmem>>, vector<1x16x256xf32>
    %67 = vector.shape_cast %66 : vector<1x16x256xf32> to vector<16x256xf32>
    %68 = vector.shape_cast %65 : vector<16x256xf32> to vector<1x16x256xf32>
    tpu.vector_store %arg9[%c0_60, %c0_61, %c0_62], %68 {strides = array<i32>} : memref<1x16x256xf32, #tpu.memory_space<vmem>>, vector<1x16x256xf32>,
    return
  }
  func.func @transform_0(%arg0: i32) -> (i32, i32, i32) {
    %c0_i32 = arith.constant 0 : i32
    %c0_i32_0 = arith.constant 0 : i32
    %c0_i32_1 = arith.constant 0 : i32
    return %arg0, %c0_i32, %c0_i32_0 : i32, i32, i32
  }
  func.func @transform_1(%arg0: i32) -> (i32, i32) {
    %c0_i32 = arith.constant 0 : i32
    %c0_i32_0 = arith.constant 0 : i32
    %c0_i32_1 = arith.constant 0 : i32
    return %c0_i32, %c0_i32_0 : i32, i32
  }
  func.func @transform_2(%arg0: i32) -> (i32, i32) {
    %c0_i32 = arith.constant 0 : i32
    %c0_i32_0 = arith.constant 0 : i32
    %c0_i32_1 = arith.constant 0 : i32
    return %c0_i32, %c0_i32_0 : i32, i32
  }
  func.func @transform_3(%arg0: i32) -> (i32, i32) {
    %c0_i32 = arith.constant 0 : i32
    %c0_i32_0 = arith.constant 0 : i32
    %c0_i32_1 = arith.constant 0 : i32
    return %c0_i32, %c0_i32_0 : i32, i32
  }
  func.func @transform_4(%arg0: i32) -> (i32, i32) {
    %c0_i32 = arith.constant 0 : i32
    %c0_i32_0 = arith.constant 0 : i32
    %c0_i32_1 = arith.constant 0 : i32
    return %c0_i32, %c0_i32_0 : i32, i32
  }
  func.func @transform_5(%arg0: i32) -> (i32, i32) {
    %c0_i32 = arith.constant 0 : i32
    %c0_i32_0 = arith.constant 0 : i32
    %c0_i32_1 = arith.constant 0 : i32
    return %c0_i32, %c0_i32_0 : i32, i32
  }
  func.func @transform_6(%arg0: i32) -> (i32, i32) {
    %c0_i32 = arith.constant 0 : i32
    %c0_i32_0 = arith.constant 0 : i32
    %c0_i32_1 = arith.constant 0 : i32
    return %c0_i32, %c0_i32_0 : i32, i32
  }
  func.func @transform_7(%arg0: i32) -> (i32, i32) {
    %c0_i32 = arith.constant 0 : i32
    %c0_i32_0 = arith.constant 0 : i32
    %c0_i32_1 = arith.constant 0 : i32
    return %c0_i32, %c0_i32_0 : i32, i32
  }
  func.func @transform_8(%arg0: i32) -> (i32, i32, i32) {
    %c0_i32 = arith.constant 0 : i32
    %c0_i32_0 = arith.constant 0 : i32
    %c0_i32_1 = arith.constant 0 : i32
    return %arg0, %c0_i32, %c0_i32_0 : i32, i32, i32
  }
}

</mosaic_0001>

<llo_original>
// kernel: tpu_custom_call.1
$region0: #{tpu_custom_call.1}
  #allocation0 [shape = 'u32[]', space=smem, size = 0x4, offset = 0x4, fixed_abs, tag = 'smem constant byte address 0x4 - core index']
  #allocation1 [shape = 'u32[144,128]{1,0:T(1,128)}', space=vmem, size = 0x12000, scoped, tag = 'internal scratch']
  #allocation2 [shape = 'f32[4,512]{1,0:T(4,128)}', space=vmem, size = 0x2000, scoped, tag = 'scratch operand']
  #allocation3 [shape = 'f32[72,256]{1,0:T(8,128)}', space=vmem, size = 0x12000, scoped, tag = 'scratch operand']
  %s0 = inlined_call_operand.hbm [shape: f32[2,16,256], index: 0, kind: input, shape index: {}]
  %s1 = inlined_call_operand.hbm [shape: f32[2,256], index: 1, kind: input, shape index: {}]
  %s2 = inlined_call_operand.hbm [shape: f32[4,16], index: 2, kind: input, shape index: {}]
  %s3 = inlined_call_operand.hbm [shape: f32[4,1], index: 3, kind: input, shape index: {}]
  %s4 = inlined_call_operand.hbm [shape: f32[4,72], index: 4, kind: input, shape index: {}]
  %s5 = inlined_call_operand.hbm [shape: f32[4,1], index: 5, kind: input, shape index: {}]
  %s6 = inlined_call_operand.hbm [shape: f32[16,4], index: 6, kind: input, shape index: {}]
  %s7 = inlined_call_operand.hbm [shape: f32[16,1], index: 7, kind: input, shape index: {}]
  %s8 = inlined_call_operand.hbm [shape: f32[2,16,256], index: 8, kind: output, shape index: {}]
  %s9 = sld [smem:[#allocation0]]
  $region97: #{tpu_custom_call.1} parent=0
    _
  %s11 = ssub.s32 1, %s9
  %s12 = scalar_select 0, %s11, %s9
  $region1: #{tpu_custom_call.1} parent=0
    #allocation4 [shape = 'u8[32768]{0}', space=vmem, size = 0x8000, scoped, tag = 'input window, operand 0']
    #allocation5 [shape = 's32[2]{0}', space=sflag, size = 0x8, scoped, tag = 'scoped memory for tpu_custom_call.1']
    #allocation6 [shape = 's32[2]{0}', space=sflag, size = 0x8, scoped, tag = 'scoped memory for tpu_custom_call.1']
    #allocation7 [shape = 'u8[2048]{0}', space=vmem, size = 0x800, scoped, tag = 'input window, operand 1, single buffered']
    #allocation8 [shape = 's32[1]{0}', space=sflag, size = 0x4, scoped, tag = 'scoped memory for tpu_custom_call.1']
    #allocation9 [shape = 'u8[2048]{0}', space=vmem, size = 0x800, scoped, tag = 'input window, operand 2, single buffered']
    #allocation10 [shape = 'u8[2048]{0}', space=vmem, size = 0x800, scoped, tag = 'input window, operand 3, single buffered']
    #allocation11 [shape = 's32[1]{0}', space=sflag, size = 0x4, scoped, tag = 'scoped memory for tpu_custom_call.1']
    #allocation12 [shape = 'u8[2048]{0}', space=vmem, size = 0x800, scoped, tag = 'input window, operand 4, single buffered']
    #allocation13 [shape = 'u8[2048]{0}', space=vmem, size = 0x800, scoped, tag = 'input window, operand 5, single buffered']
    #allocation14 [shape = 's32[1]{0}', space=sflag, size = 0x4, scoped, tag = 'scoped memory for tpu_custom_call.1']
    #allocation15 [shape = 'u8[8192]{0}', space=vmem, size = 0x2000, scoped, tag = 'input window, operand 6, single buffered']
    #allocation16 [shape = 'u8[8192]{0}', space=vmem, size = 0x2000, scoped, tag = 'input window, operand 7, single buffered']
    #allocation17 [shape = 's32[1]{0}', space=sflag, size = 0x4, scoped, tag = 'scoped memory for tpu_custom_call.1']
    #allocation18 [shape = 'u8[32768]{0}', space=vmem, size = 0x8000, scoped, tag = 'output window, operand 0']
    %13 = vsyncpa [#allocation5], 0
    %s14 = scalar_lea.sflag [#allocation5], 1
    %15 = vsyncpa %s14, 0
    %16 = vsyncpa [#allocation8], 0
    %17 = vsyncpa [#allocation11], 0
    %18 = vsyncpa [#allocation14], 0
    %19 = vsyncpa [#allocation17], 0
    %20 = vsyncpa [#allocation6], 0
    %s21 = scalar_lea.sflag [#allocation6], 1
    %22 = vsyncpa %s21, 0
    loop: start=0, step=1, limit=4
    $region2: #{tpu_custom_call.1} parent=1 // loop_pre_header
      _
    $region3: #{tpu_custom_call.1} parent=1 // loop_header
      %s24 = sphi 0, %s28
      %p25 = scmp.ge.s32.totalorder %s24, 4
      %s34 = sphi 0, %s36
      %s37 = sphi 0, %s34
      %s38 = sphi 0, %s37
      %s54 = sphi 0, %s38
      %s58 = sphi 0, %s58
      %s60 = sphi 0, %s58
      %s61 = sphi 0, %s60
      %s75 = sphi 0, %s61
      %s79 = sphi 0, %s79
      %s81 = sphi 0, %s79
      %s82 = sphi 0, %s81
      %s96 = sphi 0, %s82
      %s100 = sphi 0, %s100
      %s102 = sphi 0, %s100
      %s103 = sphi 0, %s102
      %s117 = sphi 0, %s103
      %s121 = sphi 0, %s121
      %s123 = sphi 0, %s121
      %s124 = sphi 0, %s123
      %s138 = sphi 0, %s124
      %s142 = sphi 0, %s142
      %s144 = sphi 0, %s142
      %s145 = sphi 0, %s144
      %s159 = sphi 0, %s145
      %s163 = sphi 0, %s163
      %s165 = sphi 0, %s163
      %s166 = sphi 0, %s165
      %s180 = sphi 0, %s166
      %s184 = sphi 0, %s184
      %s186 = sphi 0, %s184
      %s187 = sphi 0, %s186
      %s201 = sphi 0, %s187
      %s207 = sphi 0, %s209
      %s210 = sphi 0, %s207
      %s211 = sphi 0, %s210
      %s227 = sphi 0, %s211
    $region4: #{tpu_custom_call.1} parent=1 // loop_header_branch
      %27 = sbr.rel (%p25) target = $region8
    $region5: #{tpu_custom_call.1} parent=1 // loop_body
      %s29 = ssub.s32 %s24, 1
      %s30 = ssub.s32 %s24, 2
      %s31 = sadd.s32 %s24, 1
      %s32 = ssub.s32 %s24, %s31
      %p33 = scmp.eq.s32.totalorder %s32, 0
      %s35 = sadd.s32 %s34, 1
      %s36 = scalar_select %p33, %s34, %s35
      %p39 = pneg %p33
      %p40 = scmp.eq.s32.totalorder %s24, 1
      %p41 = por %p39, %p40
      %p42 = scmp.ne.s32.totalorder %s34, %s37
      %p43 = scmp.eq.s32.totalorder %s24, 0
      %p44 = por %p42, %p43
      %p45 = scmp.ne.s32.totalorder %s34, %s37
      %p46 = scmp.eq.s32.totalorder %s29, 1
      %p47 = por %p45, %p46
      %p48 = scmp.ne.s32.totalorder %s37, %s38
      %p49 = scmp.eq.s32.totalorder %s29, 0
      %p50 = por %p48, %p49
      %p51 = scmp.ne.s32.totalorder %s37, %s38
      %p52 = scmp.eq.s32.totalorder %s30, 1
      %p53 = por %p51, %p52
      %p55 = scmp.ne.s32.totalorder %s38, %s54
      %p56 = scmp.eq.s32.totalorder %s30, 0
      %p57 = por %p55, %p56
      %s59 = sadd.s32 %s58, 1
      %p62 = scmp.eq.s32.totalorder %s24, 1
      %p63 = scmp.ne.s32.totalorder %s58, %s60
      %p64 = scmp.eq.s32.totalorder %s24, 0
      %p65 = por %p63, %p64
      %p66 = scmp.ne.s32.totalorder %s58, %s60
      %p67 = scmp.eq.s32.totalorder %s29, 1
      %p68 = por %p66, %p67
      %p69 = scmp.ne.s32.totalorder %s60, %s61
      %p70 = scmp.eq.s32.totalorder %s29, 0
      %p71 = por %p69, %p70
      %p72 = scmp.ne.s32.totalorder %s60, %s61
      %p73 = scmp.eq.s32.totalorder %s30, 1
      %p74 = por %p72, %p73
      %p76 = scmp.ne.s32.totalorder %s61, %s75
      %p77 = scmp.eq.s32.totalorder %s30, 0
      %p78 = por %p76, %p77
      %s80 = sadd.s32 %s79, 1
      %p83 = scmp.eq.s32.totalorder %s24, 1
      %p84 = scmp.ne.s32.totalorder %s79, %s81
      %p85 = scmp.eq.s32.totalorder %s24, 0
      %p86 = por %p84, %p85
      %p87 = scmp.ne.s32.totalorder %s79, %s81
      %p88 = scmp.eq.s32.totalorder %s29, 1
      %p89 = por %p87, %p88
      %p90 = scmp.ne.s32.totalorder %s81, %s82
      %p91 = scmp.eq.s32.totalorder %s29, 0
      %p92 = por %p90, %p91
      %p93 = scmp.ne.s32.totalorder %s81, %s82
      %p94 = scmp.eq.s32.totalorder %s30, 1
      %p95 = por %p93, %p94
      %p97 = scmp.ne.s32.totalorder %s82, %s96
      %p98 = scmp.eq.s32.totalorder %s30, 0
      %p99 = por %p97, %p98
      %s101 = sadd.s32 %s100, 1
      %p104 = scmp.eq.s32.totalorder %s24, 1
      %p105 = scmp.ne.s32.totalorder %s100, %s102
      %p106 = scmp.eq.s32.totalorder %s24, 0
      %p107 = por %p105, %p106
      %p108 = scmp.ne.s32.totalorder %s100, %s102
      %p109 = scmp.eq.s32.totalorder %s29, 1
      %p110 = por %p108, %p109
      %p111 = scmp.ne.s32.totalorder %s102, %s103
      %p112 = scmp.eq.s32.totalorder %s29, 0
      %p113 = por %p111, %p112
      %p114 = scmp.ne.s32.totalorder %s102, %s103
      %p115 = scmp.eq.s32.totalorder %s30, 1
      %p116 = por %p114, %p115
      %p118 = scmp.ne.s32.totalorder %s103, %s117
      %p119 = scmp.eq.s32.totalorder %s30, 0
      %p120 = por %p118, %p119
      %s122 = sadd.s32 %s121, 1
      %p125 = scmp.eq.s32.totalorder %s24, 1
      %p126 = scmp.ne.s32.totalorder %s121, %s123
      %p127 = scmp.eq.s32.totalorder %s24, 0
      %p128 = por %p126, %p127
      %p129 = scmp.ne.s32.totalorder %s121, %s123
      %p130 = scmp.eq.s32.totalorder %s29, 1
      %p131 = por %p129, %p130
      %p132 = scmp.ne.s32.totalorder %s123, %s124
      %p133 = scmp.eq.s32.totalorder %s29, 0
      %p134 = por %p132, %p133
      %p135 = scmp.ne.s32.totalorder %s123, %s124
      %p136 = scmp.eq.s32.totalorder %s30, 1
      %p137 = por %p135, %p136
      %p139 = scmp.ne.s32.totalorder %s124, %s138
      %p140 = scmp.eq.s32.totalorder %s30, 0
      %p141 = por %p139, %p140
      %s143 = sadd.s32 %s142, 1
      %p146 = scmp.eq.s32.totalorder %s24, 1
      %p147 = scmp.ne.s32.totalorder %s142, %s144
      %p148 = scmp.eq.s32.totalorder %s24, 0
      %p149 = por %p147, %p148
      %p150 = scmp.ne.s32.totalorder %s142, %s144
      %p151 = scmp.eq.s32.totalorder %s29, 1
      %p152 = por %p150, %p151
      %p153 = scmp.ne.s32.totalorder %s144, %s145
      %p154 = scmp.eq.s32.totalorder %s29, 0
      %p155 = por %p153, %p154
      %p156 = scmp.ne.s32.totalorder %s144, %s145
      %p157 = scmp.eq.s32.totalorder %s30, 1
      %p158 = por %p156, %p157
      %p160 = scmp.ne.s32.totalorder %s145, %s159
      %p161 = scmp.eq.s32.totalorder %s30, 0
      %p162 = por %p160, %p161
      %s164 = sadd.s32 %s163, 1
      %p167 = scmp.eq.s32.totalorder %s24, 1
      %p168 = scmp.ne.s32.totalorder %s163, %s165
      %p169 = scmp.eq.s32.totalorder %s24, 0
      %p170 = por %p168, %p169
      %p171 = scmp.ne.s32.totalorder %s163, %s165
      %p172 = scmp.eq.s32.totalorder %s29, 1
      %p173 = por %p171, %p172
      %p174 = scmp.ne.s32.totalorder %s165, %s166
      %p175 = scmp.eq.s32.totalorder %s29, 0
      %p176 = por %p174, %p175
      %p177 = scmp.ne.s32.totalorder %s165, %s166
      %p178 = scmp.eq.s32.totalorder %s30, 1
      %p179 = por %p177, %p178
      %p181 = scmp.ne.s32.totalorder %s166, %s180
      %p182 = scmp.eq.s32.totalorder %s30, 0
      %p183 = por %p181, %p182
      %s185 = sadd.s32 %s184, 1
      %p188 = scmp.eq.s32.totalorder %s24, 1
      %p189 = scmp.ne.s32.totalorder %s184, %s186
      %p190 = scmp.eq.s32.totalorder %s24, 0
      %p191 = por %p189, %p190
      %p192 = scmp.ne.s32.totalorder %s184, %s186
      %p193 = scmp.eq.s32.totalorder %s29, 1
      %p194 = por %p192, %p193
      %p195 = scmp.ne.s32.totalorder %s186, %s187
      %p196 = scmp.eq.s32.totalorder %s29, 0
      %p197 = por %p195, %p196
      %p198 = scmp.ne.s32.totalorder %s186, %s187
      %p199 = scmp.eq.s32.totalorder %s30, 1
      %p200 = por %p198, %p199
      %p202 = scmp.ne.s32.totalorder %s187, %s201
      %p203 = scmp.eq.s32.totalorder %s30, 0
      %p204 = por %p202, %p203
      %s205 = ssub.s32 %s24, %s31
      %p206 = scmp.eq.s32.totalorder %s205, 0
      %s208 = sadd.s32 %s207, 1
      %s209 = scalar_select %p206, %s207, %s208
      %p212 = pneg %p206
      %p213 = scmp.eq.s32.totalorder %s24, 1
      %p214 = por %p212, %p213
      %p215 = scmp.ne.s32.totalorder %s207, %s210
      %p216 = scmp.eq.s32.totalorder %s24, 0
      %p217 = por %p215, %p216
      %p218 = scmp.ne.s32.totalorder %s207, %s210
      %p219 = scmp.eq.s32.totalorder %s29, 1
      %p220 = por %p218, %p219
      %p221 = scmp.ne.s32.totalorder %s210, %s211
      %p222 = scmp.eq.s32.totalorder %s29, 0
      %p223 = por %p221, %p222
      %p224 = scmp.ne.s32.totalorder %s210, %s211
      %p225 = scmp.eq.s32.totalorder %s30, 1
      %p226 = por %p224, %p225
      %p228 = scmp.ne.s32.totalorder %s211, %s227
      %p229 = scmp.eq.s32.totalorder %s30, 0
      %p230 = por %p228, %p229
      %p231 = scmp.le.s32.totalorder 1, %s24
      %p232 = scmp.lt.s32.totalorder %s24, 3
      %p233 = pnand %p231, %p232
      %p234 = pneg %p233
      // Predicated region
      $region9: #{tpu_custom_call.1} parent=5 // pred_check
        _
      $region10: #{tpu_custom_call.1} parent=5 // pred_check_branch
        %236 = sbr.rel (%p233) target = $region12
      $region11: #{tpu_custom_call.1} parent=5 // pred_region
        %s237 = ssub.s32 %s24, 1
        // Predicated region
        $region13: #{tpu_custom_call.1} parent=11 // pred_check
          %p238 = pneg %p71
        $region14: #{tpu_custom_call.1} parent=11 // pred_check_branch
          %240 = sbr.rel (%p238) target = $region16
        $region15: #{tpu_custom_call.1} parent=11 // pred_region
          %s242 = ssub.s32 64, 64
          %243 = vsyncadd [#allocation8], %s242
          %s245 = sshll.u32 [#allocation7], 4
          %s246 = int_to_ptr.vmem [resolvable:$true] %s245
          %248 = dma.hbm_to_vmem [thread:$0]  %s1, 64, %s246, [#allocation8]
        $region16: #{tpu_custom_call.1} parent=11 // pred_fallthru
          _
        // Predicated region
        $region17: #{tpu_custom_call.1} parent=11 // pred_check
          %p249 = pneg %p92
        $region18: #{tpu_custom_call.1} parent=11 // pred_check_branch
          %251 = sbr.rel (%p249) target = $region20
        $region19: #{tpu_custom_call.1} parent=11 // pred_region
          %s253 = ssub.s32 64, 64
          %254 = vsyncadd [#allocation8], %s253
          %s256 = sshll.u32 [#allocation9], 4
          %s257 = int_to_ptr.vmem [resolvable:$true] %s256
          %259 = dma.hbm_to_vmem [thread:$0]  %s2, 64, %s257, [#allocation8]
        $region20: #{tpu_custom_call.1} parent=11 // pred_fallthru
          _
        // Predicated region
        $region21: #{tpu_custom_call.1} parent=11 // pred_check
          %p260 = pneg %p113
        $region22: #{tpu_custom_call.1} parent=11 // pred_check_branch
          %262 = sbr.rel (%p260) target = $region24
        $region23: #{tpu_custom_call.1} parent=11 // pred_region
          %s264 = ssub.s32 64, 64
          %265 = vsyncadd [#allocation11], %s264
          %s267 = sshll.u32 [#allocation10], 4
          %s268 = int_to_ptr.vmem [resolvable:$true] %s267
          %270 = dma.hbm_to_vmem [thread:$0]  %s3, 64, %s268, [#allocation11]
        $region24: #{tpu_custom_call.1} parent=11 // pred_fallthru
          _
        // Predicated region
        $region25: #{tpu_custom_call.1} parent=11 // pred_check
          %p271 = pneg %p134
        $region26: #{tpu_custom_call.1} parent=11 // pred_check_branch
          %273 = sbr.rel (%p271) target = $region28
        $region27: #{tpu_custom_call.1} parent=11 // pred_region
          %s275 = ssub.s32 64, 64
          %276 = vsyncadd [#allocation11], %s275
          %s278 = sshll.u32 [#allocation12], 4
          %s279 = int_to_ptr.vmem [resolvable:$true] %s278
          %281 = dma.hbm_to_vmem [thread:$0]  %s4, 64, %s279, [#allocation11]
        $region28: #{tpu_custom_call.1} parent=11 // pred_fallthru
          _
        // Predicated region
        $region29: #{tpu_custom_call.1} parent=11 // pred_check
          %p282 = pneg %p155
        $region30: #{tpu_custom_call.1} parent=11 // pred_check_branch
          %284 = sbr.rel (%p282) target = $region32
        $region31: #{tpu_custom_call.1} parent=11 // pred_region
          %s286 = ssub.s32 64, 64
          %287 = vsyncadd [#allocation14], %s286
          %s289 = sshll.u32 [#allocation13], 4
          %s290 = int_to_ptr.vmem [resolvable:$true] %s289
          %292 = dma.hbm_to_vmem [thread:$0]  %s5, 64, %s290, [#allocation14]
        $region32: #{tpu_custom_call.1} parent=11 // pred_fallthru
          _
        // Predicated region
        $region33: #{tpu_custom_call.1} parent=11 // pred_check
          %p293 = pneg %p176
        $region34: #{tpu_custom_call.1} parent=11 // pred_check_branch
          %295 = sbr.rel (%p293) target = $region36
        $region35: #{tpu_custom_call.1} parent=11 // pred_region
          %s297 = ssub.s32 256, 256
          %298 = vsyncadd [#allocation14], %s297
          %s299 = sshll.u32 [#allocation15], 4
          %s300 = int_to_ptr.vmem [resolvable:$true] %s299
          %305 = dma.hbm_to_vmem [thread:$0]  %s6, 256, %s300, [#allocation14], 128, 128, 8
        $region36: #{tpu_custom_call.1} parent=11 // pred_fallthru
          _
        // Predicated region
        $region37: #{tpu_custom_call.1} parent=11 // pred_check
          %p306 = pneg %p197
        $region38: #{tpu_custom_call.1} parent=11 // pred_check_branch
          %308 = sbr.rel (%p306) target = $region40
        $region39: #{tpu_custom_call.1} parent=11 // pred_region
          %s310 = ssub.s32 256, 256
          %311 = vsyncadd [#allocation17], %s310
          %s312 = sshll.u32 [#allocation16], 4
          %s313 = int_to_ptr.vmem [resolvable:$true] %s312
          %318 = dma.hbm_to_vmem [thread:$0]  %s7, 256, %s313, [#allocation17], 128, 128, 8
        $region40: #{tpu_custom_call.1} parent=11 // pred_fallthru
          _
      $region12: #{tpu_custom_call.1} parent=5 // pred_fallthru
        _
      %p319 = scmp.lt.s32.totalorder %s24, 2
      // Predicated region
      $region41: #{tpu_custom_call.1} parent=5 // pred_check
        %p320 = pneg %p319
      $region42: #{tpu_custom_call.1} parent=5 // pred_check_branch
        %322 = sbr.rel (%p320) target = $region44
      $region43: #{tpu_custom_call.1} parent=5 // pred_region
        // Predicated region
        $region45: #{tpu_custom_call.1} parent=43 // pred_check
          %p323 = pneg %p44
        $region46: #{tpu_custom_call.1} parent=43 // pred_check_branch
          %325 = sbr.rel (%p323) target = $region48
        $region47: #{tpu_custom_call.1} parent=43 // pred_region
          %s326 = sand.u32 %s34, 1
          %s327 = scalar_lea.sflag [#allocation5], %s326
          %s328 = sand.u32 %s34, 1
          %s329 = smul.addr %s328, 32
          %s330 = scalar_lea.vmem [#allocation4], %s329
          %s332 = ssub.s32 512, 512
          %333 = vsyncadd %s327, %s332
          %s334 = smul.addr %s24, 4
          %s335 = smul.addr %s334, 128
          %s336 = scalar_lea.hbm %s0, %s335
          %s337 = sshll.u32 %s330, 4
          %s338 = int_to_ptr.vmem [resolvable:$true] %s337
          %343 = dma.hbm_to_vmem [thread:$0]  %s336, 512, %s338, %s327, 256, 256, 16
        $region48: #{tpu_custom_call.1} parent=43 // pred_fallthru
          _
      $region44: #{tpu_custom_call.1} parent=5 // pred_fallthru
        _
      %p344 = scmp.le.s32.totalorder 1, %s24
      %p345 = scmp.lt.s32.totalorder %s24, 3
      %p346 = pnand %p344, %p345
      %p347 = pneg %p346
      // Predicated region
      $region49: #{tpu_custom_call.1} parent=5 // pred_check
        _
      $region50: #{tpu_custom_call.1} parent=5 // pred_check_branch
        %349 = sbr.rel (%p346) target = $region52
      $region51: #{tpu_custom_call.1} parent=5 // pred_region
        %s350 = ssub.s32 %s24, 1
        %s351 = sand.u32 %s37, 1
        %s352 = scalar_lea.sflag [#allocation5], %s351
        %s353 = sand.u32 %s37, 1
        %s354 = smul.addr %s353, 32
        %s355 = scalar_lea.vmem [#allocation4], %s354
        // Predicated region
        $region53: #{tpu_custom_call.1} parent=51 // pred_check
          %p356 = pneg %p50
        $region54: #{tpu_custom_call.1} parent=51 // pred_check_branch
          %358 = sbr.rel (%p356) target = $region56
        $region55: #{tpu_custom_call.1} parent=51 // pred_region
          %359 = dma.done %s352, 512
        $region56: #{tpu_custom_call.1} parent=51 // pred_fallthru
          _
        // Predicated region
        $region57: #{tpu_custom_call.1} parent=51 // pred_check
          %p360 = pneg %p71
        $region58: #{tpu_custom_call.1} parent=51 // pred_check_branch
          %362 = sbr.rel (%p360) target = $region60
        $region59: #{tpu_custom_call.1} parent=51 // pred_region
          %363 = dma.done [#allocation8], 64
        $region60: #{tpu_custom_call.1} parent=51 // pred_fallthru
          _
        // Predicated region
        $region61: #{tpu_custom_call.1} parent=51 // pred_check
          %p364 = pneg %p92
        $region62: #{tpu_custom_call.1} parent=51 // pred_check_branch
          %366 = sbr.rel (%p364) target = $region64
        $region63: #{tpu_custom_call.1} parent=51 // pred_region
          %367 = dma.done [#allocation8], 64
        $region64: #{tpu_custom_call.1} parent=51 // pred_fallthru
          _
        // Predicated region
        $region65: #{tpu_custom_call.1} parent=51 // pred_check
          %p368 = pneg %p113
        $region66: #{tpu_custom_call.1} parent=51 // pred_check_branch
          %370 = sbr.rel (%p368) target = $region68
        $region67: #{tpu_custom_call.1} parent=51 // pred_region
          %371 = dma.done [#allocation11], 64
        $region68: #{tpu_custom_call.1} parent=51 // pred_fallthru
          _
        // Predicated region
        $region69: #{tpu_custom_call.1} parent=51 // pred_check
          %p372 = pneg %p134
        $region70: #{tpu_custom_call.1} parent=51 // pred_check_branch
          %374 = sbr.rel (%p372) target = $region72
        $region71: #{tpu_custom_call.1} parent=51 // pred_region
          %375 = dma.done [#allocation11], 64
        $region72: #{tpu_custom_call.1} parent=51 // pred_fallthru
          _
        // Predicated region
        $region73: #{tpu_custom_call.1} parent=51 // pred_check
          %p376 = pneg %p155
        $region74: #{tpu_custom_call.1} parent=51 // pred_check_branch
          %378 = sbr.rel (%p376) target = $region76
        $region75: #{tpu_custom_call.1} parent=51 // pred_region
          %379 = dma.done [#allocation14], 64
        $region76: #{tpu_custom_call.1} parent=51 // pred_fallthru
          _
        // Predicated region
        $region77: #{tpu_custom_call.1} parent=51 // pred_check
          %p380 = pneg %p176
        $region78: #{tpu_custom_call.1} parent=51 // pred_check_branch
          %382 = sbr.rel (%p380) target = $region80
        $region79: #{tpu_custom_call.1} parent=51 // pred_region
          %383 = dma.done [#allocation14], 256
        $region80: #{tpu_custom_call.1} parent=51 // pred_fallthru
          _
        // Predicated region
        $region81: #{tpu_custom_call.1} parent=51 // pred_check
          %p384 = pneg %p197
        $region82: #{tpu_custom_call.1} parent=51 // pred_check_branch
          %386 = sbr.rel (%p384) target = $region84
        $region83: #{tpu_custom_call.1} parent=51 // pred_region
          %387 = dma.done [#allocation17], 256
        $region84: #{tpu_custom_call.1} parent=51 // pred_fallthru
          _
        %s388 = sand.u32 %s37, 1
        %s389 = scalar_lea.sflag [#allocation5], %s388
        %s390 = sand.u32 %s37, 1
        %s391 = smul.addr %s390, 32
        %s392 = scalar_lea.vmem [#allocation4], %s391
        %p393 = pneg %p50
        %p394 = pneg %p47
        %p395 = pneg %p71
        %p396 = pneg %p68
        %p397 = pneg %p92
        %p398 = pneg %p89
        %p399 = pneg %p113
        %p400 = pneg %p110
        %p401 = pneg %p134
        %p402 = pneg %p131
        %p403 = pneg %p155
        %p404 = pneg %p152
        %p405 = pneg %p176
        %p406 = pneg %p173
        %p407 = pneg %p197
        %p408 = pneg %p194
        %p409 = pneg %p223
        %p410 = pneg %p220
        %s411 = sand.u32 %s210, 1
        %s412 = scalar_lea.sflag [#allocation6], %s411
        %s413 = sand.u32 %s210, 1
        %s414 = smul.addr %s413, 32
        %s415 = scalar_lea.vmem [#allocation18], %s414
        %v416 = vld [vmem:[%s355] sm:$0xff]
        %v417 = vld [vmem:[%s355 + $0x8] sm:$0xff]
        %v418 = vld [vmem:[%s355 + $0x10] sm:$0xff]
        %v419 = vld [vmem:[%s355 + $0x18] sm:$0xff]
        %v420 = vld [vmem:[#allocation9] sm:$0xf]
        %v421 = vld [vmem:[#allocation10] sm:$0xf]
        %423 = vset.pattern.permute.xlu0 0
        %424 = vperm.xlu0 %423, %v421
        %v425 = vpop.permute.xlu0 %424
        %vm427 = vcmask 130048
        %v429 = vsel %vm427, %v420, 0
        %431 = vmatprep.subr.mxu0 %v417
        %432 = vmatpush1.msra.mxu0 %v416
        %433 = vmatprep.subr.mxu0 %v419
        %434 = vmatpush1.msra.mxu0 %v418
        %435 = vmatprep.subr.mxu0 0.0
        %436 = vmatpush1.msra.mxu0 0.0
        %437 = vmatprep.subr.mxu0 0.0
        %438 = vmatpush1.msra.mxu0 0.0
        %439 = vmatprep.subr.mxu0 0.0
        %440 = vmatpush1.msra.mxu0 0.0
        %441 = vmatprep.subr.mxu0 0.0
        %442 = vmatpush1.msra.mxu0 0.0
        %443 = vmatprep.subr.mxu0 0.0
        %444 = vmatpush1.msra.mxu0 0.0
        %445 = vmatprep.subr.mxu0 0.0
        %446 = vmatpush1.msra.mxu0 0.0
        %447 = vmatprep.subr.mxu0 0.0
        %448 = vmatpush1.msra.mxu0 0.0
        %449 = vmatprep.subr.mxu0 0.0
        %450 = vmatpush1.msra.mxu0 0.0
        %451 = vmatprep.subr.mxu0 0.0
        %452 = vmatpush1.msra.mxu0 0.0
        %453 = vmatprep.subr.mxu0 0.0
        %454 = vmatpush1.msra.mxu0 0.0
        %455 = vmatprep.subr.mxu0 0.0
        %456 = vmatpush1.msra.mxu0 0.0
        %457 = vmatprep.subr.mxu0 0.0
        %458 = vmatpush1.msra.mxu0 0.0
        %459 = vmatprep.subr.mxu0 0.0
        %460 = vmatpush1.msra.mxu0 0.0
        %461 = vmatprep.subr.mxu0 0.0
        %462 = vmatpush1.msra.mxu0 0.0
        %463 = vmatprep.subr.mxu0 0.0
        %464 = vmatpush1.msra.mxu0 0.0
        %465 = vmatprep.subr.mxu0 0.0
        %466 = vmatpush1.msra.mxu0 0.0
        %467 = vmatprep.subr.mxu0 0.0
        %468 = vmatpush1.msra.mxu0 0.0
        %469 = vmatprep.subr.mxu0 0.0
        %470 = vmatpush1.msra.mxu0 0.0
        %471 = vmatprep.subr.mxu0 0.0
        %472 = vmatpush1.msra.mxu0 0.0
        %473 = vmatprep.subr.mxu0 0.0
        %474 = vmatpush1.msra.mxu0 0.0
        %475 = vmatprep.subr.mxu0 0.0
        %476 = vmatpush1.msra.mxu0 0.0
        %477 = vmatprep.subr.mxu0 0.0
        %478 = vmatpush1.msra.mxu0 0.0
        %479 = vmatprep.subr.mxu0 0.0
        %480 = vmatpush1.msra.mxu0 0.0
        %481 = vmatprep.subr.mxu0 0.0
        %482 = vmatpush1.msra.mxu0 0.0
        %483 = vmatprep.subr.mxu0 0.0
        %484 = vmatpush1.msra.mxu0 0.0
        %485 = vmatprep.subr.mxu0 0.0
        %486 = vmatpush1.msra.mxu0 0.0
        %487 = vmatprep.subr.mxu0 0.0
        %488 = vmatpush1.msra.mxu0 0.0
        %489 = vmatprep.subr.mxu0 0.0
        %490 = vmatpush1.msra.mxu0 0.0
        %491 = vmatprep.subr.mxu0 0.0
        %492 = vmatpush1.msra.mxu0 0.0
        %493 = vmatprep.subr.mxu0 0.0
        %494 = vmatpush1.msra.mxu0 0.0
        %495 = vmatprep.mubr.f32.mxu0 0.0
        %496 = vmatmul.mubr.f32.gmra.mrb[0].mxu0 %v429
        %v497 = vpop.f32.mrb[0].mxu0
        %v498 = vadd.f32 %v425, %v497
        %v499 = vpop.f32.mrb[0].mxu0
        %v500 = vadd.f32 %v425, %v499
        %501 = vdwg.mxu0
        %v502 = vmax.f32 %v498, 0.0
        %v503 = vmax.f32 %v500, 0.0
        %504 = vst [vmem:[#allocation2] sm:$0xf] 0.0
        %505 = vst [vmem:[#allocation2 + $0xc] sm:$0xf] 0.0
        %v508 = vcombine.low %v502, %v503
        %510 = vst [vmem:[#allocation2 + $0x4] sm:$0xff] %v508
        %511 = vst [vmem:[#allocation3] sm:$0xff] 0.0
        %512 = vst [vmem:[#allocation3 + $0x8] sm:$0xff] 0.0
        %513 = vst [vmem:[#allocation3 + $0x10] sm:$0xff] 0.0
        %514 = vst [vmem:[#allocation3 + $0x18] sm:$0xff] 0.0
        %515 = vst [vmem:[#allocation3 + $0x20] sm:$0xff] 0.0
        %516 = vst [vmem:[#allocation3 + $0x28] sm:$0xff] 0.0
        %517 = vst [vmem:[#allocation3 + $0x30] sm:$0xff] 0.0
        %518 = vst [vmem:[#allocation3 + $0x38] sm:$0xff] 0.0
        %519 = vst [vmem:[#allocation3 + $0x40] sm:$0xff] 0.0
        %520 = vst [vmem:[#allocation3 + $0x48] sm:$0xff] 0.0
        %521 = vst [vmem:[#allocation3 + $0x50] sm:$0xff] 0.0
        %522 = vst [vmem:[#allocation3 + $0x58] sm:$0xff] 0.0
        %523 = vst [vmem:[#allocation3 + $0x60] sm:$0xff] 0.0
        %524 = vst [vmem:[#allocation3 + $0x68] sm:$0xff] 0.0
        %525 = vst [vmem:[#allocation3 + $0x70] sm:$0xff] 0.0
        %526 = vst [vmem:[#allocation3 + $0x78] sm:$0xff] 0.0
        %527 = vst [vmem:[#allocation3 + $0x80] sm:$0xff] 0.0
        %528 = vst [vmem:[#allocation3 + $0x88] sm:$0xff] 0.0
        %v529 = vld [vmem:[#allocation2] sm:$0xff]
        %v530 = vld [vmem:[#allocation2 + $0x8] sm:$0xf]
        %v531 = vld [vmem:[#allocation7] ss:$2 sm:$0x3]
        %v533 = vlaneseq
        %v534 = vshrl.u32 %v533, 7
        %v535 = vsub.s32 0, %v534
        %v536 = vrot.slane %v531, %v535
        %v537 = vlaneseq
        %v538 = vshrl.u32 %v537, 7
        %v539 = vsub.s32 1, %v538
        %v540 = vrot.slane %v531, %v539
        %v541 = vcombine.low %v536, %v540
        %542 = vrot.lane.b32.xlu0 %v541, 111
        %v543 = vpop.permute.xlu0 %542
        %v544 = vrot.slane %v543, 4
        %vm545 = vcmask 908288
        %v546 = vsel %vm545, %v544, %v543
        %v549 = vmul.f32 %v529, %v546
        %v550 = vmul.f32 %v530, %v544
        %v553 = vcombine.high %v549, %v549
        %554 = vrot.lane.b32.xlu0 %v549, 17
        %v555 = vpop.permute.xlu0 %554
        %556 = vrot.lane.b32.xlu0 %v553, 17
        %v557 = vpop.permute.xlu0 %556
        %558 = vrot.lane.b32.xlu0 %v550, 17
        %v559 = vpop.permute.xlu0 %558
        %vm560 = vcmask 138240
        %v561 = vsel %vm560, %v555, %v557
        %v562 = vsel %vm560, %v557, %v559
        %565 = vst [vmem:[#allocation3] sm:$0xf] %v561
        %566 = vst [vmem:[#allocation3 + $0x8] sm:$0xf] %v562
        %v567 = vld [vmem:[#allocation2] sm:$0xff]
        %v568 = vld [vmem:[#allocation2 + $0x8] sm:$0xf]
        %v571 = vcombine.high %v567, %v567
        %572 = vrot.lane.b32.xlu0 %v567, 16
        %v573 = vpop.permute.xlu0 %572
        %574 = vrot.lane.b32.xlu0 %v571, 16
        %v575 = vpop.permute.xlu0 %574
        %576 = vrot.lane.b32.xlu0 %v568, 16
        %v577 = vpop.permute.xlu0 %576
        %v578 = vsel %vm427, %v573, %v575
        %v579 = vsel %vm427, %v575, %v577
        %582 = vst [vmem:[#allocation3 + $0x10] sm:$0xf] %v578
        %583 = vst [vmem:[#allocation3 + $0x18] sm:$0xf] %v579
        %v584 = vld [vmem:[#allocation2] sm:$0xff]
        %v585 = vld [vmem:[#allocation2 + $0x8] sm:$0xf]
        %s586 = scalar_lea.vmem [#allocation7], 1
        %v587 = vld [vmem:[%s586] ss:$2 sm:$0x3]
        %v589 = vlaneseq
        %v590 = vshrl.u32 %v589, 7
        %v591 = vsub.s32 0, %v590
        %v592 = vrot.slane %v587, %v591
        %v593 = vlaneseq
        %v594 = vshrl.u32 %v593, 7
        %v595 = vsub.s32 1, %v594
        %v596 = vrot.slane %v587, %v595
        %v597 = vcombine.low %v592, %v596
        %598 = vrot.lane.b32.xlu0 %v597, 113
        %v599 = vpop.permute.xlu0 %598
        %v600 = vrot.slane %v599, 4
        %vm601 = vcmask 924672
        %v602 = vsel %vm601, %v600, %v599
        %v605 = vmul.f32 %v584, %v602
        %v606 = vmul.f32 %v585, %v600
        %v609 = vcombine.high %v605, %v605
        %610 = vrot.lane.b32.xlu0 %v605, 15
        %v611 = vpop.permute.xlu0 %610
        %612 = vrot.lane.b32.xlu0 %v609, 15
        %v613 = vpop.permute.xlu0 %612
        %614 = vrot.lane.b32.xlu0 %v606, 15
        %v615 = vpop.permute.xlu0 %614
        %vm616 = vcmask 121856
        %v617 = vsel %vm616, %v611, %v613
        %v618 = vsel %vm616, %v613, %v615
        %621 = vst [vmem:[#allocation3 + $0x20] sm:$0xf] %v617
        %622 = vst [vmem:[#allocation3 + $0x28] sm:$0xf] %v618
        %v623 = vld [vmem:[#allocation2] sm:$0xff]
        %v624 = vld [vmem:[#allocation2 + $0x8] sm:$0xf]
        %v625 = vld [vmem:[#allocation7] ss:$2 sm:$0x3]
        %v627 = vlaneseq
        %v628 = vshrl.u32 %v627, 7
        %v629 = vsub.s32 0, %v628
        %v630 = vrot.slane %v625, %v629
        %v631 = vlaneseq
        %v632 = vshrl.u32 %v631, 7
        %v633 = vsub.s32 1, %v632
        %v634 = vrot.slane %v625, %v633
        %v635 = vcombine.low %v630, %v634
        %636 = vrot.lane.b32.xlu0 %v635, 127
        %v637 = vpop.permute.xlu0 %636
        %v638 = vrot.slane %v637, 4
        %vm639 = vcmask 1039360
        %v640 = vsel %vm639, %v638, %v637
        %v643 = vmul.f32 %v623, %v640
        %v644 = vmul.f32 %v624, %v638
        %v647 = vcombine.high %v643, %v643
        %648 = vrot.lane.b32.xlu0 %v643, 1
        %v649 = vpop.permute.xlu0 %648
        %650 = vrot.lane.b32.xlu0 %v647, 1
        %v651 = vpop.permute.xlu0 %650
        %652 = vrot.lane.b32.xlu0 %v644, 1
        %v653 = vpop.permute.xlu0 %652
        %vm654 = vcmask 7168
        %v655 = vsel %vm654, %v649, %v651
        %v656 = vsel %vm654, %v651, %v653
        %659 = vst [vmem:[#allocation3 + $0x30] sm:$0xf] %v655
        %660 = vst [vmem:[#allocation3 + $0x38] sm:$0xf] %v656
        %v661 = vld [vmem:[#allocation2 + $0x4] sm:$0xff]
        %v663 = vcombine.high %v661, %v661
        %665 = vst [vmem:[#allocation3 + $0x40] sm:$0xf] %v661
        %666 = vst [vmem:[#allocation3 + $0x48] sm:$0xf] %v663
        %v667 = vld [vmem:[#allocation2 + $0x4] sm:$0xff]
        %v668 = vld [vmem:[#allocation2 + $0xc] sm:$0xf]
        %v669 = vld [vmem:[%s586] ss:$2 sm:$0x3]
        %v671 = vlaneseq
        %v672 = vshrl.u32 %v671, 7
        %v673 = vsub.s32 0, %v672
        %v674 = vrot.slane %v669, %v673
        %v675 = vlaneseq
        %v676 = vshrl.u32 %v675, 7
        %v677 = vsub.s32 1, %v676
        %v678 = vrot.slane %v669, %v677
        %v679 = vcombine.low %v674, %v678
        %680 = vrot.lane.b32.xlu0 %v679, 1
        %v681 = vpop.permute.xlu0 %680
        %v682 = vrot.slane %v681, 4
        %v683 = vsel %vm654, %v682, %v681
        %v686 = vmul.f32 %v667, %v683
        %v687 = vmul.f32 %v668, %v682
        %v690 = vcombine.high %v686, %v686
        %691 = vrot.lane.b32.xlu0 %v686, 127
        %v692 = vpop.permute.xlu0 %691
        %693 = vrot.lane.b32.xlu0 %v690, 127
        %v694 = vpop.permute.xlu0 %693
        %695 = vrot.lane.b32.xlu0 %v687, 127
        %v696 = vpop.permute.xlu0 %695
        %v697 = vsel %vm639, %v692, %v694
        %v698 = vsel %vm639, %v694, %v696
        %701 = vst [vmem:[#allocation3 + $0x50] sm:$0xf] %v697
        %702 = vst [vmem:[#allocation3 + $0x58] sm:$0xf] %v698
        %v703 = vld [vmem:[#allocation2 + $0x4] sm:$0xff]
        %v704 = vld [vmem:[#allocation2 + $0xc] sm:$0xf]
        %v705 = vld [vmem:[#allocation7] ss:$2 sm:$0x3]
        %v707 = vlaneseq
        %v708 = vshrl.u32 %v707, 7
        %v709 = vsub.s32 0, %v708
        %v710 = vrot.slane %v705, %v709
        %v711 = vlaneseq
        %v712 = vshrl.u32 %v711, 7
        %v713 = vsub.s32 1, %v712
        %v714 = vrot.slane %v705, %v713
        %v715 = vcombine.low %v710, %v714
        %716 = vrot.lane.b32.xlu0 %v715, 15
        %v717 = vpop.permute.xlu0 %716
        %v718 = vrot.slane %v717, 4
        %v719 = vsel %vm616, %v718, %v717
        %v722 = vmul.f32 %v703, %v719
        %v723 = vmul.f32 %v704, %v718
        %v726 = vcombine.high %v722, %v722
        %727 = vrot.lane.b32.xlu0 %v722, 113
        %v728 = vpop.permute.xlu0 %727
        %729 = vrot.lane.b32.xlu0 %v726, 113
        %v730 = vpop.permute.xlu0 %729
        %731 = vrot.lane.b32.xlu0 %v723, 113
        %v732 = vpop.permute.xlu0 %731
        %v733 = vsel %vm601, %v728, %v730
        %v734 = vsel %vm601, %v730, %v732
        %737 = vst [vmem:[#allocation3 + $0x60] sm:$0xf] %v733
        %738 = vst [vmem:[#allocation3 + $0x68] sm:$0xf] %v734
        %v739 = vld [vmem:[#allocation2 + $0x4] sm:$0xff]
        %v740 = vld [vmem:[#allocation2 + $0xc] sm:$0xf]
        %v743 = vcombine.high %v739, %v739
        %744 = vrot.lane.b32.xlu0 %v739, 112
        %v745 = vpop.permute.xlu0 %744
        %746 = vrot.lane.b32.xlu0 %v743, 112
        %v747 = vpop.permute.xlu0 %746
        %748 = vrot.lane.b32.xlu0 %v740, 112
        %v749 = vpop.permute.xlu0 %748
        %vm750 = vcmask 916480
        %v751 = vsel %vm750, %v745, %v747
        %v752 = vsel %vm750, %v747, %v749
        %755 = vst [vmem:[#allocation3 + $0x70] sm:$0xf] %v751
        %756 = vst [vmem:[#allocation3 + $0x78] sm:$0xf] %v752
        %v757 = vld [vmem:[#allocation2 + $0x4] sm:$0xff]
        %v758 = vld [vmem:[#allocation2 + $0xc] sm:$0xf]
        %v759 = vld [vmem:[%s586] ss:$2 sm:$0x3]
        %v761 = vlaneseq
        %v762 = vshrl.u32 %v761, 7
        %v763 = vsub.s32 0, %v762
        %v764 = vrot.slane %v759, %v763
        %v765 = vlaneseq
        %v766 = vshrl.u32 %v765, 7
        %v767 = vsub.s32 1, %v766
        %v768 = vrot.slane %v759, %v767
        %v769 = vcombine.low %v764, %v768
        %770 = vrot.lane.b32.xlu0 %v769, 17
        %v771 = vpop.permute.xlu0 %770
        %v772 = vrot.slane %v771, 4
        %v773 = vsel %vm560, %v772, %v771
        %v776 = vmul.f32 %v757, %v773
        %v777 = vmul.f32 %v758, %v772
        %v780 = vcombine.high %v776, %v776
        %781 = vrot.lane.b32.xlu0 %v776, 111
        %v782 = vpop.permute.xlu0 %781
        %783 = vrot.lane.b32.xlu0 %v780, 111
        %v784 = vpop.permute.xlu0 %783
        %785 = vrot.lane.b32.xlu0 %v777, 111
        %v786 = vpop.permute.xlu0 %785
        %v787 = vsel %vm545, %v782, %v784
        %v788 = vsel %vm545, %v784, %v786
        %791 = vst [vmem:[#allocation3 + $0x80] sm:$0xf] %v787
        %792 = vst [vmem:[#allocation3 + $0x88] sm:$0xf] %v788
        %v793 = vld [vmem:[#allocation12] sm:$0xf]
        %v794 = vld [vmem:[#allocation3] sm:$0xff]
        %v795 = vld [vmem:[#allocation3 + $0x8] sm:$0xff]
        %v796 = vld [vmem:[#allocation3 + $0x10] sm:$0xff]
        %v797 = vld [vmem:[#allocation3 + $0x18] sm:$0xff]
        %v798 = vld [vmem:[#allocation3 + $0x20] sm:$0xff]
        %v799 = vld [vmem:[#allocation3 + $0x28] sm:$0xff]
        %v800 = vld [vmem:[#allocation3 + $0x30] sm:$0xff]
        %v801 = vld [vmem:[#allocation3 + $0x38] sm:$0xff]
        %v802 = vld [vmem:[#allocation3 + $0x40] sm:$0xff]
        %v803 = vld [vmem:[#allocation3 + $0x48] sm:$0xff]
        %v804 = vld [vmem:[#allocation3 + $0x50] sm:$0xff]
        %v805 = vld [vmem:[#allocation3 + $0x58] sm:$0xff]
        %v806 = vld [vmem:[#allocation3 + $0x60] sm:$0xff]
        %v807 = vld [vmem:[#allocation3 + $0x68] sm:$0xff]
        %v808 = vld [vmem:[#allocation3 + $0x70] sm:$0xff]
        %v809 = vld [vmem:[#allocation3 + $0x78] sm:$0xff]
        %v810 = vld [vmem:[#allocation3 + $0x80] sm:$0xff]
        %v811 = vld [vmem:[#allocation3 + $0x88] sm:$0xff]
        %v812 = vld [vmem:[#allocation13] sm:$0xf]
        %814 = vset.pattern.permute.xlu0 0
        %815 = vperm.xlu0 %814, %v812
        %v816 = vpop.permute.xlu0 %815
        %vm818 = vcmask 588800
        %v820 = vsel %vm818, %v793, 0
        %822 = vmatprep.subr.mxu0 %v795
        %823 = vmatpush1.msra.mxu0 %v794
        %824 = vmatprep.subr.mxu0 %v797
        %825 = vmatpush1.msra.mxu0 %v796
        %826 = vmatprep.subr.mxu0 %v799
        %827 = vmatpush1.msra.mxu0 %v798
        %828 = vmatprep.subr.mxu0 %v801
        %829 = vmatpush1.msra.mxu0 %v800
        %830 = vmatprep.subr.mxu0 %v803
        %831 = vmatpush1.msra.mxu0 %v802
        %832 = vmatprep.subr.mxu0 %v805
        %833 = vmatpush1.msra.mxu0 %v804
        %834 = vmatprep.subr.mxu0 %v807
        %835 = vmatpush1.msra.mxu0 %v806
        %836 = vmatprep.subr.mxu0 %v809
        %837 = vmatpush1.msra.mxu0 %v808
        %838 = vmatprep.subr.mxu0 %v811
        %839 = vmatpush1.msra.mxu0 %v810
        %840 = vmatprep.subr.mxu0 0.0
        %841 = vmatpush1.msra.mxu0 0.0
        %842 = vmatprep.subr.mxu0 0.0
        %843 = vmatpush1.msra.mxu0 0.0
        %844 = vmatprep.subr.mxu0 0.0
        %845 = vmatpush1.msra.mxu0 0.0
        %846 = vmatprep.subr.mxu0 0.0
        %847 = vmatpush1.msra.mxu0 0.0
        %848 = vmatprep.subr.mxu0 0.0
        %849 = vmatpush1.msra.mxu0 0.0
        %850 = vmatprep.subr.mxu0 0.0
        %851 = vmatpush1.msra.mxu0 0.0
        %852 = vmatprep.subr.mxu0 0.0
        %853 = vmatpush1.msra.mxu0 0.0
        %854 = vmatprep.subr.mxu0 0.0
        %855 = vmatpush1.msra.mxu0 0.0
        %856 = vmatprep.subr.mxu0 0.0
        %857 = vmatpush1.msra.mxu0 0.0
        %858 = vmatprep.subr.mxu0 0.0
        %859 = vmatpush1.msra.mxu0 0.0
        %860 = vmatprep.subr.mxu0 0.0
        %861 = vmatpush1.msra.mxu0 0.0
        %862 = vmatprep.subr.mxu0 0.0
        %863 = vmatpush1.msra.mxu0 0.0
        %864 = vmatprep.subr.mxu0 0.0
        %865 = vmatpush1.msra.mxu0 0.0
        %866 = vmatprep.subr.mxu0 0.0
        %867 = vmatpush1.msra.mxu0 0.0
        %868 = vmatprep.subr.mxu0 0.0
        %869 = vmatpush1.msra.mxu0 0.0
        %870 = vmatprep.subr.mxu0 0.0
        %871 = vmatpush1.msra.mxu0 0.0
        %872 = vmatprep.subr.mxu0 0.0
        %873 = vmatpush1.msra.mxu0 0.0
        %874 = vmatprep.subr.mxu0 0.0
        %875 = vmatpush1.msra.mxu0 0.0
        %876 = vmatprep.subr.mxu0 0.0
        %877 = vmatpush1.msra.mxu0 0.0
        %878 = vmatprep.subr.mxu0 0.0
        %879 = vmatpush1.msra.mxu0 0.0
        %880 = vmatprep.subr.mxu0 0.0
        %881 = vmatpush1.msra.mxu0 0.0
        %882 = vmatprep.subr.mxu0 0.0
        %883 = vmatpush1.msra.mxu0 0.0
        %884 = vmatprep.subr.mxu0 0.0
        %885 = vmatpush1.msra.mxu0 0.0
        %886 = vmatprep.mubr.f32.mxu0 0.0
        %887 = vmatmul.mubr.f32.gmra.mrb[0].mxu0 %v820
        %v888 = vpop.f32.mrb[0].mxu0
        %v889 = vadd.f32 %v816, %v888
        %v890 = vpop.f32.mrb[0].mxu0
        %v891 = vadd.f32 %v816, %v890
        %892 = vdwg.mxu0
        %v893 = vmax.f32 %v889, 0.0
        %v894 = vmax.f32 %v891, 0.0
        %v895 = vld [vmem:[#allocation15] sm:$0xff]
        %v896 = vld [vmem:[#allocation15 + $0x8] sm:$0xff]
        %v897 = vld [vmem:[#allocation16] sm:$0xff]
        %v898 = vld [vmem:[#allocation16 + $0x8] sm:$0xff]
        %900 = vset.pattern.permute.xlu0 0
        %901 = vperm.xlu0 %900, %v897
        %v902 = vpop.permute.xlu0 %901
        %905 = vset.pattern.permute.xlu0 0
        %906 = vperm.xlu0 %905, %v898
        %v907 = vpop.permute.xlu0 %906
        %vm909 = vcmask 31744
        %v911 = vsel %vm909, %v895, 0
        %v914 = vsel %vm909, %v896, 0
        %vm916 = vcmask 1043456
        %v918 = vsel %vm916, %v893, 0
        %v921 = vsel %vm916, %v894, 0
        %923 = vmatprep.subr.mxu0 %v921
        %924 = vmatpush1.msra.mxu0 %v918
        %925 = vmatprep.subr.mxu0 0.0
        %926 = vmatpush1.msra.mxu0 0.0
        %927 = vmatprep.subr.mxu0 0.0
        %928 = vmatpush1.msra.mxu0 0.0
        %929 = vmatprep.subr.mxu0 0.0
        %930 = vmatpush1.msra.mxu0 0.0
        %931 = vmatprep.subr.mxu0 0.0
        %932 = vmatpush1.msra.mxu0 0.0
        %933 = vmatprep.subr.mxu0 0.0
        %934 = vmatpush1.msra.mxu0 0.0
        %935 = vmatprep.subr.mxu0 0.0
        %936 = vmatpush1.msra.mxu0 0.0
        %937 = vmatprep.subr.mxu0 0.0
        %938 = vmatpush1.msra.mxu0 0.0
        %939 = vmatprep.subr.mxu0 0.0
        %940 = vmatpush1.msra.mxu0 0.0
        %941 = vmatprep.subr.mxu0 0.0
        %942 = vmatpush1.msra.mxu0 0.0
        %943 = vmatprep.subr.mxu0 0.0
        %944 = vmatpush1.msra.mxu0 0.0
        %945 = vmatprep.subr.mxu0 0.0
        %946 = vmatpush1.msra.mxu0 0.0
        %947 = vmatprep.subr.mxu0 0.0
        %948 = vmatpush1.msra.mxu0 0.0
        %949 = vmatprep.subr.mxu0 0.0
        %950 = vmatpush1.msra.mxu0 0.0
        %951 = vmatprep.subr.mxu0 0.0
        %952 = vmatpush1.msra.mxu0 0.0
        %953 = vmatprep.subr.mxu0 0.0
        %954 = vmatpush1.msra.mxu0 0.0
        %955 = vmatprep.subr.mxu0 0.0
        %956 = vmatpush1.msra.mxu0 0.0
        %957 = vmatprep.subr.mxu0 0.0
        %958 = vmatpush1.msra.mxu0 0.0
        %959 = vmatprep.subr.mxu0 0.0
        %960 = vmatpush1.msra.mxu0 0.0
        %961 = vmatprep.subr.mxu0 0.0
        %962 = vmatpush1.msra.mxu0 0.0
        %963 = vmatprep.subr.mxu0 0.0
        %964 = vmatpush1.msra.mxu0 0.0
        %965 = vmatprep.subr.mxu0 0.0
        %966 = vmatpush1.msra.mxu0 0.0
        %967 = vmatprep.subr.mxu0 0.0
        %968 = vmatpush1.msra.mxu0 0.0
        %969 = vmatprep.subr.mxu0 0.0
        %970 = vmatpush1.msra.mxu0 0.0
        %971 = vmatprep.subr.mxu0 0.0
        %972 = vmatpush1.msra.mxu0 0.0
        %973 = vmatprep.subr.mxu0 0.0
        %974 = vmatpush1.msra.mxu0 0.0
        %975 = vmatprep.subr.mxu0 0.0
        %976 = vmatpush1.msra.mxu0 0.0
        %977 = vmatprep.subr.mxu0 0.0
        %978 = vmatpush1.msra.mxu0 0.0
        %979 = vmatprep.subr.mxu0 0.0
        %980 = vmatpush1.msra.mxu0 0.0
        %981 = vmatprep.subr.mxu0 0.0
        %982 = vmatpush1.msra.mxu0 0.0
        %983 = vmatprep.subr.mxu0 0.0
        %984 = vmatpush1.msra.mxu0 0.0
        %985 = vmatprep.subr.mxu0 0.0
        %986 = vmatpush1.msra.mxu0 0.0
        %987 = vmatprep.mubr.f32.mxu0 0.0
        %988 = vmatmul.mubr.f32.gmra.mrb[0].mxu0 %v911
        %v989 = vpop.f32.mrb[0].mxu0
        %v990 = vadd.f32 %v902, %v989
        %v991 = vpop.f32.mrb[0].mxu0
        %v992 = vadd.f32 %v902, %v991
        %993 = vmatprep.mubr.f32.mxu0 0.0
        %994 = vmatmul.mubr.f32.gmra.mrb[0].mxu0 %v914
        %v995 = vpop.f32.mrb[0].mxu0
        %v996 = vadd.f32 %v907, %v995
        %v997 = vpop.f32.mrb[0].mxu0
        %v998 = vadd.f32 %v907, %v997
        %999 = vdwg.mxu0
        %v1000 = vadd.f32 %v990, %v416
        %v1001 = vadd.f32 %v992, %v417
        %v1002 = vadd.f32 %v996, %v418
        %v1003 = vadd.f32 %v998, %v419
        %1004 = vst [vmem:[%s415] sm:$0xff] %v1000
        %1005 = vst [vmem:[%s415 + $0x8] sm:$0xff] %v1001
        %1006 = vst [vmem:[%s415 + $0x10] sm:$0xff] %v1002
        %1007 = vst [vmem:[%s415 + $0x18] sm:$0xff] %v1003
        %s1008 = sand.u32 %s210, 1
        %s1009 = scalar_lea.sflag [#allocation6], %s1008
        %s1010 = sand.u32 %s210, 1
        %s1011 = smul.addr %s1010, 32
        %s1012 = scalar_lea.vmem [#allocation18], %s1011
        // Predicated region
        $region85: #{tpu_custom_call.1} parent=51 // pred_check
          %p1013 = pneg %p220
        $region86: #{tpu_custom_call.1} parent=51 // pred_check_branch
          %1015 = sbr.rel (%p1013) target = $region88
        $region87: #{tpu_custom_call.1} parent=51 // pred_region
          %s1017 = ssub.s32 512, 512
          %1018 = vsyncadd %s1009, %s1017
          %s1019 = smul.addr %s29, 4
          %s1020 = smul.addr %s1019, 128
          %s1021 = scalar_lea.hbm %s8, %s1020
          %s1022 = sshll.u32 %s1012, 4
          %s1023 = int_to_ptr.vmem [resolvable:$true] %s1022
          %1028 = dma.vmem_to_hbm [thread:$0]  %s1023, 512, %s1021, %s1009, 256, 256, 16
        $region88: #{tpu_custom_call.1} parent=51 // pred_fallthru
          _
      $region52: #{tpu_custom_call.1} parent=5 // pred_fallthru
        _
      %p1029 = scmp.le.s32.totalorder 2, %s24
      // Predicated region
      $region89: #{tpu_custom_call.1} parent=5 // pred_check
        %p1030 = pneg %p1029
      $region90: #{tpu_custom_call.1} parent=5 // pred_check_branch
        %1032 = sbr.rel (%p1030) target = $region92
      $region91: #{tpu_custom_call.1} parent=5 // pred_region
        %s1033 = ssub.s32 %s24, 2
        // Predicated region
        $region93: #{tpu_custom_call.1} parent=91 // pred_check
          %p1034 = pneg %p226
        $region94: #{tpu_custom_call.1} parent=91 // pred_check_branch
          %1036 = sbr.rel (%p1034) target = $region96
        $region95: #{tpu_custom_call.1} parent=91 // pred_region
          %s1037 = sand.u32 %s211, 1
          %s1038 = scalar_lea.sflag [#allocation6], %s1037
          %s1039 = sand.u32 %s211, 1
          %s1040 = smul.addr %s1039, 32
          %s1041 = scalar_lea.vmem [#allocation18], %s1040
          %1042 = dma.done %s1038, 512
        $region96: #{tpu_custom_call.1} parent=91 // pred_fallthru
          _
      $region92: #{tpu_custom_call.1} parent=5 // pred_fallthru
        _
    $region6: #{tpu_custom_call.1} parent=1 // loop_footer
      %s28 = sadd.s32 1, %s24
    $region7: #{tpu_custom_call.1} parent=1 // loop_footer_branch
      %23 = sbr.rel target = $region3
    $region8: #{tpu_custom_call.1} parent=1 // loop_exit
      _
    %1043 = vsyncpa [#allocation5], 1
    %s1044 = scalar_lea.sflag [#allocation5], 1
    %1045 = vsyncpa %s1044, 1
    %1046 = vsyncpa [#allocation8], 1
    %1047 = vsyncpa [#allocation11], 1
    %1048 = vsyncpa [#allocation14], 1
    %1049 = vsyncpa [#allocation17], 1
    %1050 = vsyncpa [#allocation6], 1
    %s1051 = scalar_lea.sflag [#allocation6], 1
    %1052 = vsyncpa %s1051, 1

</llo_original>
